<compile_context>
chip_gen: v5e
topology: v5e:2x2
jax: 0.10.0
libtpu: 0.0.40
codegen_flags: <defaults>
</compile_context>

<pallas_src>
import jax
import jax.numpy as jnp
from jax.experimental import pallas as pl
from jax.experimental.pallas import tpu as pltpu

# (alpha_index, beta_index, gamma_index) triples from the PyTorch module.
_TRIPLES = [
    (2, 1, 1), (2, 2, 2), (2, 0, 0), (0, 0, 0), (0, 2, 0),
    (1, 1, 1), (1, 2, 1), (2, 3, 3), (3, 2, 3),
]
_NOT_TRIPLES = [
    (0, 3, 2), (0, 3, 1), (1, 3, 2), (1, 3, 0),
    (3, 0, 2), (3, 0, 1), (3, 1, 2), (3, 1, 0),
]
_NOT_GAMMAS = sorted({g for _, _, g in _NOT_TRIPLES})   # only {0, 1, 2} are used
_VERY_SMALL = 1e-08
_LANES = 128
_SUBLANES = 8
_STRIP = 8                 # one f32 vreg (8 sublanes x 128 lanes) per class row
_MAX_TILE_ROWS = 1024      # ~13 MiB double-buffered f32 input: safe on v5e/v6e/v7x
_MIN_GRID_STEPS = 2        # let v7x's 2 TensorCores split the batch grid


def _round_up(x, m):
    return (x + m - 1) // m * m


def _transitivity_kernel(w9_ref, a_ref, b_ref, g_ref, out_ref):
    # w9_ref            : [9] f32 in SMEM (scalar-prefetched triple weights)
    # a_ref/b_ref/g_ref : [4, tile_rows, 128] logits, class-major
    # out_ref           : [tile_rows, 128] f32 per-example loss
    tile_rows = a_ref.shape[1]
    n_strips = tile_rows // _STRIP

    # Hoist the 9 SMEM scalar reads AND their vector broadcasts out of the
    # strip loop (computed once per grid step).
    w_vec = [jnp.full((_STRIP, _LANES), w9_ref[t], dtype=jnp.float32)
             for t in range(len(_TRIPLES))]

    def strip(r, carry):
        off = pl.multiple_of(r * _STRIP, _STRIP)
        sl = pl.ds(off, _STRIP)

        def shifted_softmax(ref):
            rows = [ref[c, sl, :].astype(jnp.float32) for c in range(4)]
            m = jnp.maximum(jnp.maximum(rows[0], rows[1]),
                            jnp.maximum(rows[2], rows[3]))
            sh = [row - m for row in rows]
            e = [jnp.exp(s) for s in sh]
            den = (e[0] + e[1]) + (e[2] + e[3])
            return sh, e, den, jnp.log(den)

        sh_a, _, _, logd_a = shifted_softmax(a_ref)
        sh_b, _, _, logd_b = shifted_softmax(b_ref)
        sh_g, e_g, den_g, logd_g = shifted_softmax(g_ref)

        # log_a[ai] + log_b[bi] - log_g[gi]
        #   == sh_a[ai] + sh_b[bi] - (sh_g[gi] + logd_corr)
        logd_corr = (logd_a + logd_b) - logd_g
        sg_adj = [sh_g[c] + logd_corr for c in range(4)]

        # log_a[ai] + log_b[bi] - log(max(1 - softmax_g[gi], eps))
        #   == sh_a[ai] + sh_b[bi]
        #      - (log(max(den_g - e_g[gi], den_g*eps)) + logd_corr)
        # (no divide / reciprocal needed; e_g/den_g die right here)
        floor = den_g * _VERY_SMALL
        ln_adj = {c: jnp.log(jnp.maximum(den_g - e_g[c], floor)) + logd_corr
                  for c in _NOT_GAMMAS}

        loss = jnp.zeros((_STRIP, _LANES), jnp.float32)
        for t, (ai, bi, gi) in enumerate(_TRIPLES):
            hinge = jnp.maximum(sh_a[ai] + sh_b[bi] - sg_adj[gi], 0.0)
            loss = loss + hinge * w_vec[t]

        ab_cache = {}
        for (ai, bi, gi) in _NOT_TRIPLES:
            if (ai, bi) not in ab_cache:
                ab_cache[(ai, bi)] = sh_a[ai] + sh_b[bi]
            loss = loss + jnp.maximum(ab_cache[(ai, bi)] - ln_adj[gi], 0.0)

        out_ref[sl, :] = loss          # aligned, lane-dense, unmasked store
        return carry

    unroll = 2 if (n_strips >= 2 and n_strips % 2 == 0) else 1
    if unroll > 1:
        jax.lax.fori_loop(0, n_strips, strip, None, unroll=unroll)
    else:
        jax.lax.fori_loop(0, n_strips, strip, None)


def transitivity_loss_H(alpha_logits, beta_logits, gamma_logits,
                        label_weight_H=None, *, max_tile_rows=_MAX_TILE_ROWS,
                        slab_dtype=None):
    """Per-example transitivity loss of shape [B] (matches the PyTorch module).

    slab_dtype: optional narrower dtype (e.g. jnp.bfloat16) for the relayouted
    slab; halves HBM traffic (useful on v5e/v6e) but quantizes the logits
    before the in-kernel f32 softmax.
    """
    B = alpha_logits.shape[0]

    # --- slab dtype: keep source dtype (bf16 inputs halve DMA) unless told
    #     otherwise; anything exotic falls back to f32.
    if slab_dtype is None:
        slab_dtype = alpha_logits.dtype
        if (not jnp.issubdtype(slab_dtype, jnp.floating)
                or jnp.dtype(slab_dtype).itemsize > 4):
            slab_dtype = jnp.float32
    slab_dtype = jnp.dtype(slab_dtype)

    # --- tile sizing: multiple of 8 rows, capped (VMEM), and >= 2 grid steps
    #     whenever there is enough work so v7x's 2 TCs both get a share.
    rows = pl.cdiv(B, _LANES)
    rows8 = _round_up(rows, _SUBLANES)
    max_tile_rows = _round_up(max(int(max_tile_rows), _SUBLANES), _SUBLANES)
    tile_rows = min(max_tile_rows,
                    _round_up(pl.cdiv(rows8, _MIN_GRID_STEPS), _SUBLANES))
    tile_rows = max(tile_rows, _SUBLANES)
    padded_rows = _round_up(rows8, tile_rows)
    padded_B = padded_rows * _LANES

    def relayout(x):
        # One transposed copy per input: [B, C] -(slice+pad)-> [padded_B, 4]
        # -> [4, padded_rows, 128]; no [B, 12] concat intermediate.
        x4 = x[:, 0:4].astype(slab_dtype)
        if padded_B != B:
            x4 = jnp.pad(x4, ((0, padded_B - B), (0, 0)))
        return x4.T.reshape(4, padded_rows, _LANES)

    a = relayout(alpha_logits)
    b = relayout(beta_logits)
    g = relayout(gamma_logits)

    # Precompute the 9 weighted-triple scalars (wsum / w[idx] / 64) once.
    # NOTE: zero entries in label_weight_H give inf/NaN, same as the reference.
    if label_weight_H is None:
        w9 = jnp.ones((len(_TRIPLES),), jnp.float32)
    else:
        lw = label_weight_H.astype(jnp.float32)
        idx = jnp.asarray([ai * 16 + bi * 4 + gi for ai, bi, gi in _TRIPLES],
                          jnp.int32)
        w9 = lw.sum() / lw[idx] / 64.0

    grid_steps = padded_rows // tile_rows

    # VMEM budget from the actual double-buffered footprint (+50% headroom).
    in_block_bytes = 4 * tile_rows * _LANES * slab_dtype.itemsize
    out_block_bytes = tile_rows * _LANES * 4
    vmem_bytes = 3 * 2 * in_block_bytes + 2 * out_block_bytes
    vmem_limit = min(100 * 2**20, max(32 * 2**20, (vmem_bytes * 3) // 2))

    n_elems = padded_rows * _LANES
    cost = pl.CostEstimate(
        flops=int(130 * n_elems),
        transcendentals=int(18 * n_elems),
        bytes_accessed=int(3 * 4 * n_elems * slab_dtype.itemsize + 4 * n_elems),
    )

    out = pl.pallas_call(
        _transitivity_kernel,
        out_shape=jax.ShapeDtypeStruct((padded_rows, _LANES), jnp.float32),
        grid_spec=pltpu.PrefetchScalarGridSpec(
            num_scalar_prefetch=1,
            grid=(grid_steps,),
            in_specs=[
                pl.BlockSpec((4, tile_rows, _LANES), lambda i, w: (0, i, 0)),
                pl.BlockSpec((4, tile_rows, _LANES), lambda i, w: (0, i, 0)),
                pl.BlockSpec((4, tile_rows, _LANES), lambda i, w: (0, i, 0)),
            ],
            out_specs=pl.BlockSpec((tile_rows, _LANES), lambda i, w: (i, 0)),
        ),
        compiler_params=pltpu.CompilerParams(
            dimension_semantics=("parallel",),   # shard batch grid on v7x's 2 TCs
            vmem_limit_bytes=int(vmem_limit),
        ),
        cost_estimate=cost,
    )(w9, a, b, g)
    return out.reshape(-1)[:B]


def _reference(alpha_logits, beta_logits, gamma_logits, label_weight_H=None):
    """Pure-JAX reference mirroring the PyTorch forward, for validation."""
    log_a = jax.nn.log_softmax(alpha_logits[:, 0:4].astype(jnp.float32), axis=1)
    log_b = jax.nn.log_softmax(beta_logits[:, 0:4].astype(jnp.float32), axis=1)
    log_g = jax.nn.log_softmax(gamma_logits[:, 0:4].astype(jnp.float32), axis=1)
    log_not_g = jnp.log(jnp.maximum(1.0 - jnp.exp(log_g), _VERY_SMALL))

    loss = jnp.zeros(log_a.shape[0], jnp.float32)
    for (ai, bi, gi) in _TRIPLES:
        if label_weight_H is None:
            label_w = 1.0
        else:
            lw = label_weight_H.astype(jnp.float32)
            label_w = lw.sum() / lw[ai * 16 + bi * 4 + gi] / 64.0
        loss = loss + jnp.maximum(
            log_a[:, ai] + log_b[:, bi] - log_g[:, gi], 0.0) * label_w
    for (ai, bi, gi) in _NOT_TRIPLES:
        loss = loss + jnp.maximum(
            log_a[:, ai] + log_b[:, bi] - log_not_g[:, gi], 0.0)
    return loss


if __name__ == "__main__":
    key = jax.random.PRNGKey(0)
    ks = jax.random.split(key, 10)

    # Small shapes consistent with the module: batch=8, classes=6 (so the
    # [:, 0:4] slice is exercised), label_weight_H has 64 entries.
    B, C = 8, 6
    alpha = jax.random.normal(ks[0], (B, C), jnp.float32)
    beta = jax.random.normal(ks[1], (B, C), jnp.float32)
    gamma = jax.random.normal(ks[2], (B, C), jnp.float32)
    lw = jax.random.uniform(ks[3], (64,), jnp.float32, minval=0.5, maxval=2.0)

    out_w = jax.block_until_ready(transitivity_loss_H(alpha, beta, gamma, lw))
    ref_w = _reference(alpha, beta, gamma, lw)
    assert out_w.shape == (B,)
    assert jnp.allclose(out_w, ref_w, atol=1e-4, rtol=1e-4)

    # label_weight_H=None path.
    out_n = jax.block_until_ready(transitivity_loss_H(alpha, beta, gamma, None))
    ref_n = _reference(alpha, beta, gamma, None)
    assert jnp.allclose(out_n, ref_n, atol=1e-4, rtol=1e-4)

    # Non-multiple-of-128 batch: exercises the padding path.
    B1 = 300
    a1 = jax.random.normal(ks[4], (B1, C), jnp.float32)
    b1 = jax.random.normal(ks[5], (B1, C), jnp.float32)
    g1 = jax.random.normal(ks[6], (B1, C), jnp.float32)
    out1 = jax.block_until_ready(transitivity_loss_H(a1, b1, g1, lw))
    assert out1.shape == (B1,)
    assert jnp.allclose(out1, _reference(a1, b1, g1, lw), atol=1e-4, rtol=1e-4)

    # Multi-block + multi-strip path with default tiling (grid=2, 2 strips/blk).
    B2 = 4096
    a2 = jax.random.normal(ks[7], (B2, C), jnp.float32)
    b2 = jax.random.normal(ks[8], (B2, C), jnp.float32)
    g2 = jax.random.normal(ks[9], (B2, C), jnp.float32)
    out2 = jax.block_until_ready(transitivity_loss_H(a2, b2, g2, lw))
    ref2 = _reference(a2, b2, g2, lw)
    assert out2.shape == (B2,)
    assert jnp.allclose(out2, ref2, atol=1e-4, rtol=1e-4)

    # Forced small tile: 4 grid steps with an 8-row block.
    out3 = jax.block_until_ready(
        transitivity_loss_H(a2, b2, g2, lw, max_tile_rows=8))
    assert jnp.allclose(out3, ref2, atol=1e-4, rtol=1e-4)

    # Optional bf16 slab (v5e/v6e bandwidth saver): compare against the
    # reference fed with identically quantized logits.
    out_bf = jax.block_until_ready(
        transitivity_loss_H(a2, b2, g2, lw, slab_dtype=jnp.bfloat16))
    quant = lambda x: x.astype(jnp.bfloat16).astype(jnp.float32)
    ref_bf = _reference(quant(a2), quant(b2), quant(g2), lw)
    assert jnp.all(jnp.isfinite(out_bf))
    assert jnp.allclose(out_bf, ref_bf, atol=1e-4, rtol=1e-4)

    print("KERNEL_OK")
</pallas_src>

<mosaic_0001>
module attributes {stable_mosaic.version = 11 : i64} {
  func.func @_transitivity_kernel(%arg0: i32, %arg1: memref<9xf32, #tpu.memory_space<smem>>, %arg2: memref<4x8x128xf32, #tpu.memory_space<vmem>>, %arg3: memref<4x8x128xf32, #tpu.memory_space<vmem>>, %arg4: memref<4x8x128xf32, #tpu.memory_space<vmem>>, %arg5: memref<8x128xf32, #tpu.memory_space<vmem>>) attributes {dimension_semantics = [#tpu.dimension_semantics<parallel>], iteration_bounds = array<i64: 1>, scalar_prefetch = 1 : i64, scratch_operands = 0 : i64, tpu.core_type = #tpu.core_type<tc>, window_params = [{transform_indices = @transform_0, window_bounds = array<i64: 4, 8, 128>}, {transform_indices = @transform_1, window_bounds = array<i64: 4, 8, 128>}, {transform_indices = @transform_2, window_bounds = array<i64: 4, 8, 128>}, {transform_indices = @transform_3, window_bounds = array<i64: 8, 128>}]} {
    %c0 = arith.constant 0 : index
    %0 = memref.load %arg1[%c0] : memref<9xf32, #tpu.memory_space<smem>>
    %1 = vector.broadcast %0 : f32 to vector<8x128xf32>
    %c1 = arith.constant 1 : index
    %2 = memref.load %arg1[%c1] : memref<9xf32, #tpu.memory_space<smem>>
    %3 = vector.broadcast %2 : f32 to vector<8x128xf32>
    %c2 = arith.constant 2 : index
    %4 = memref.load %arg1[%c2] : memref<9xf32, #tpu.memory_space<smem>>
    %5 = vector.broadcast %4 : f32 to vector<8x128xf32>
    %c3 = arith.constant 3 : index
    %6 = memref.load %arg1[%c3] : memref<9xf32, #tpu.memory_space<smem>>
    %7 = vector.broadcast %6 : f32 to vector<8x128xf32>
    %c4 = arith.constant 4 : index
    %8 = memref.load %arg1[%c4] : memref<9xf32, #tpu.memory_space<smem>>
    %9 = vector.broadcast %8 : f32 to vector<8x128xf32>
    %c5 = arith.constant 5 : index
    %10 = memref.load %arg1[%c5] : memref<9xf32, #tpu.memory_space<smem>>
    %11 = vector.broadcast %10 : f32 to vector<8x128xf32>
    %c6 = arith.constant 6 : index
    %12 = memref.load %arg1[%c6] : memref<9xf32, #tpu.memory_space<smem>>
    %13 = vector.broadcast %12 : f32 to vector<8x128xf32>
    %c7 = arith.constant 7 : index
    %14 = memref.load %arg1[%c7] : memref<9xf32, #tpu.memory_space<smem>>
    %15 = vector.broadcast %14 : f32 to vector<8x128xf32>
    %c8 = arith.constant 8 : index
    %16 = memref.load %arg1[%c8] : memref<9xf32, #tpu.memory_space<smem>>
    %17 = vector.broadcast %16 : f32 to vector<8x128xf32>
    %c0_i32 = arith.constant 0 : i32
    %c8_i32 = arith.constant 8 : i32
    %18 = arith.muli %c0_i32, %c8_i32 : i32
    %19 = tpu.assume_multiple %18, 8 : i32
    %c0_0 = arith.constant 0 : index
    %20 = arith.index_cast %19 : i32 to index
    %c0_1 = arith.constant 0 : index
    %21 = vector.load %arg2[%c0_0, %20, %c0_1] : memref<4x8x128xf32, #tpu.memory_space<vmem>>, vector<1x8x128xf32>
    %22 = vector.shape_cast %21 : vector<1x8x128xf32> to vector<8x128xf32>
    %c1_2 = arith.constant 1 : index
    %23 = arith.index_cast %19 : i32 to index
    %c0_3 = arith.constant 0 : index
    %24 = vector.load %arg2[%c1_2, %23, %c0_3] : memref<4x8x128xf32, #tpu.memory_space<vmem>>, vector<1x8x128xf32>
    %25 = vector.shape_cast %24 : vector<1x8x128xf32> to vector<8x128xf32>
    %c2_4 = arith.constant 2 : index
    %26 = arith.index_cast %19 : i32 to index
    %c0_5 = arith.constant 0 : index
    %27 = vector.load %arg2[%c2_4, %26, %c0_5] : memref<4x8x128xf32, #tpu.memory_space<vmem>>, vector<1x8x128xf32>
    %28 = vector.shape_cast %27 : vector<1x8x128xf32> to vector<8x128xf32>
    %c3_6 = arith.constant 3 : index
    %29 = arith.index_cast %19 : i32 to index
    %c0_7 = arith.constant 0 : index
    %30 = vector.load %arg2[%c3_6, %29, %c0_7] : memref<4x8x128xf32, #tpu.memory_space<vmem>>, vector<1x8x128xf32>
    %31 = vector.shape_cast %30 : vector<1x8x128xf32> to vector<8x128xf32>
    %32 = arith.maximumf %22, %25 : vector<8x128xf32>
    %33 = arith.maximumf %28, %31 : vector<8x128xf32>
    %34 = arith.maximumf %32, %33 : vector<8x128xf32>
    %35 = arith.subf %22, %34 : vector<8x128xf32>
    %36 = arith.subf %25, %34 : vector<8x128xf32>
    %37 = arith.subf %28, %34 : vector<8x128xf32>
    %38 = arith.subf %31, %34 : vector<8x128xf32>
    %39 = math.exp %35 : vector<8x128xf32>
    %40 = math.exp %36 : vector<8x128xf32>
    %41 = math.exp %37 : vector<8x128xf32>
    %42 = math.exp %38 : vector<8x128xf32>
    %43 = arith.addf %39, %40 : vector<8x128xf32>
    %44 = arith.addf %41, %42 : vector<8x128xf32>
    %45 = arith.addf %43, %44 : vector<8x128xf32>
    %46 = math.log %45 : vector<8x128xf32>
    %c0_8 = arith.constant 0 : index
    %47 = arith.index_cast %19 : i32 to index
    %c0_9 = arith.constant 0 : index
    %48 = vector.load %arg3[%c0_8, %47, %c0_9] : memref<4x8x128xf32, #tpu.memory_space<vmem>>, vector<1x8x128xf32>
    %49 = vector.shape_cast %48 : vector<1x8x128xf32> to vector<8x128xf32>
    %c1_10 = arith.constant 1 : index
    %50 = arith.index_cast %19 : i32 to index
    %c0_11 = arith.constant 0 : index
    %51 = vector.load %arg3[%c1_10, %50, %c0_11] : memref<4x8x128xf32, #tpu.memory_space<vmem>>, vector<1x8x128xf32>
    %52 = vector.shape_cast %51 : vector<1x8x128xf32> to vector<8x128xf32>
    %c2_12 = arith.constant 2 : index
    %53 = arith.index_cast %19 : i32 to index
    %c0_13 = arith.constant 0 : index
    %54 = vector.load %arg3[%c2_12, %53, %c0_13] : memref<4x8x128xf32, #tpu.memory_space<vmem>>, vector<1x8x128xf32>
    %55 = vector.shape_cast %54 : vector<1x8x128xf32> to vector<8x128xf32>
    %c3_14 = arith.constant 3 : index
    %56 = arith.index_cast %19 : i32 to index
    %c0_15 = arith.constant 0 : index
    %57 = vector.load %arg3[%c3_14, %56, %c0_15] : memref<4x8x128xf32, #tpu.memory_space<vmem>>, vector<1x8x128xf32>
    %58 = vector.shape_cast %57 : vector<1x8x128xf32> to vector<8x128xf32>
    %59 = arith.maximumf %49, %52 : vector<8x128xf32>
    %60 = arith.maximumf %55, %58 : vector<8x128xf32>
    %61 = arith.maximumf %59, %60 : vector<8x128xf32>
    %62 = arith.subf %49, %61 : vector<8x128xf32>
    %63 = arith.subf %52, %61 : vector<8x128xf32>
    %64 = arith.subf %55, %61 : vector<8x128xf32>
    %65 = arith.subf %58, %61 : vector<8x128xf32>
    %66 = math.exp %62 : vector<8x128xf32>
    %67 = math.exp %63 : vector<8x128xf32>
    %68 = math.exp %64 : vector<8x128xf32>
    %69 = math.exp %65 : vector<8x128xf32>
    %70 = arith.addf %66, %67 : vector<8x128xf32>
    %71 = arith.addf %68, %69 : vector<8x128xf32>
    %72 = arith.addf %70, %71 : vector<8x128xf32>
    %73 = math.log %72 : vector<8x128xf32>
    %c0_16 = arith.constant 0 : index
    %74 = arith.index_cast %19 : i32 to index
    %c0_17 = arith.constant 0 : index
    %75 = vector.load %arg4[%c0_16, %74, %c0_17] : memref<4x8x128xf32, #tpu.memory_space<vmem>>, vector<1x8x128xf32>
    %76 = vector.shape_cast %75 : vector<1x8x128xf32> to vector<8x128xf32>
    %c1_18 = arith.constant 1 : index
    %77 = arith.index_cast %19 : i32 to index
    %c0_19 = arith.constant 0 : index
    %78 = vector.load %arg4[%c1_18, %77, %c0_19] : memref<4x8x128xf32, #tpu.memory_space<vmem>>, vector<1x8x128xf32>
    %79 = vector.shape_cast %78 : vector<1x8x128xf32> to vector<8x128xf32>
    %c2_20 = arith.constant 2 : index
    %80 = arith.index_cast %19 : i32 to index
    %c0_21 = arith.constant 0 : index
    %81 = vector.load %arg4[%c2_20, %80, %c0_21] : memref<4x8x128xf32, #tpu.memory_space<vmem>>, vector<1x8x128xf32>
    %82 = vector.shape_cast %81 : vector<1x8x128xf32> to vector<8x128xf32>
    %c3_22 = arith.constant 3 : index
    %83 = arith.index_cast %19 : i32 to index
    %c0_23 = arith.constant 0 : index
    %84 = vector.load %arg4[%c3_22, %83, %c0_23] : memref<4x8x128xf32, #tpu.memory_space<vmem>>, vector<1x8x128xf32>
    %85 = vector.shape_cast %84 : vector<1x8x128xf32> to vector<8x128xf32>
    %86 = arith.maximumf %76, %79 : vector<8x128xf32>
    %87 = arith.maximumf %82, %85 : vector<8x128xf32>
    %88 = arith.maximumf %86, %87 : vector<8x128xf32>
    %89 = arith.subf %76, %88 : vector<8x128xf32>
    %90 = arith.subf %79, %88 : vector<8x128xf32>
    %91 = arith.subf %82, %88 : vector<8x128xf32>
    %92 = arith.subf %85, %88 : vector<8x128xf32>
    %93 = math.exp %89 : vector<8x128xf32>
    %94 = math.exp %90 : vector<8x128xf32>
    %95 = math.exp %91 : vector<8x128xf32>
    %96 = math.exp %92 : vector<8x128xf32>
    %97 = arith.addf %93, %94 : vector<8x128xf32>
    %98 = arith.addf %95, %96 : vector<8x128xf32>
    %99 = arith.addf %97, %98 : vector<8x128xf32>
    %100 = math.log %99 : vector<8x128xf32>
    %101 = arith.addf %46, %73 : vector<8x128xf32>
    %102 = arith.subf %101, %100 : vector<8x128xf32>
    %103 = arith.addf %89, %102 : vector<8x128xf32>
    %104 = arith.addf %90, %102 : vector<8x128xf32>
    %105 = arith.addf %91, %102 : vector<8x128xf32>
    %106 = arith.addf %92, %102 : vector<8x128xf32>
    %cst = arith.constant 9.99999993E-9 : f32
    %107 = vector.broadcast %cst : f32 to vector<8x128xf32>
    %108 = arith.mulf %99, %107 : vector<8x128xf32>
    %109 = arith.subf %99, %93 : vector<8x128xf32>
    %110 = arith.maximumf %109, %108 : vector<8x128xf32>
    %111 = math.log %110 : vector<8x128xf32>
    %112 = arith.addf %111, %102 : vector<8x128xf32>
    %113 = arith.subf %99, %94 : vector<8x128xf32>
    %114 = arith.maximumf %113, %108 : vector<8x128xf32>
    %115 = math.log %114 : vector<8x128xf32>
    %116 = arith.addf %115, %102 : vector<8x128xf32>
    %117 = arith.subf %99, %95 : vector<8x128xf32>
    %118 = arith.maximumf %117, %108 : vector<8x128xf32>
    %119 = math.log %118 : vector<8x128xf32>
    %120 = arith.addf %119, %102 : vector<8x128xf32>
    %cst_24 = arith.constant 0.000000e+00 : f32
    %121 = vector.broadcast %cst_24 : f32 to vector<8x128xf32>
    %122 = arith.addf %37, %63 : vector<8x128xf32>
    %123 = arith.subf %122, %104 : vector<8x128xf32>
    %cst_25 = arith.constant 0.000000e+00 : f32
    %124 = vector.broadcast %cst_25 : f32 to vector<8x128xf32>
    %125 = arith.maximumf %123, %124 : vector<8x128xf32>
    %126 = arith.mulf %125, %1 : vector<8x128xf32>
    %127 = arith.addf %121, %126 : vector<8x128xf32>
    %128 = arith.addf %37, %64 : vector<8x128xf32>
    %129 = arith.subf %128, %105 : vector<8x128xf32>
    %cst_26 = arith.constant 0.000000e+00 : f32
    %130 = vector.broadcast %cst_26 : f32 to vector<8x128xf32>
    %131 = arith.maximumf %129, %130 : vector<8x128xf32>
    %132 = arith.mulf %131, %3 : vector<8x128xf32>
    %133 = arith.addf %127, %132 : vector<8x128xf32>
    %134 = arith.addf %37, %62 : vector<8x128xf32>
    %135 = arith.subf %134, %103 : vector<8x128xf32>
    %cst_27 = arith.constant 0.000000e+00 : f32
    %136 = vector.broadcast %cst_27 : f32 to vector<8x128xf32>
    %137 = arith.maximumf %135, %136 : vector<8x128xf32>
    %138 = arith.mulf %137, %5 : vector<8x128xf32>
    %139 = arith.addf %133, %138 : vector<8x128xf32>
    %140 = arith.addf %35, %62 : vector<8x128xf32>
    %141 = arith.subf %140, %103 : vector<8x128xf32>
    %cst_28 = arith.constant 0.000000e+00 : f32
    %142 = vector.broadcast %cst_28 : f32 to vector<8x128xf32>
    %143 = arith.maximumf %141, %142 : vector<8x128xf32>
    %144 = arith.mulf %143, %7 : vector<8x128xf32>
    %145 = arith.addf %139, %144 : vector<8x128xf32>
    %146 = arith.addf %35, %64 : vector<8x128xf32>
    %147 = arith.subf %146, %103 : vector<8x128xf32>
    %cst_29 = arith.constant 0.000000e+00 : f32
    %148 = vector.broadcast %cst_29 : f32 to vector<8x128xf32>
    %149 = arith.maximumf %147, %148 : vector<8x128xf32>
    %150 = arith.mulf %149, %9 : vector<8x128xf32>
    %151 = arith.addf %145, %150 : vector<8x128xf32>
    %152 = arith.addf %36, %63 : vector<8x128xf32>
    %153 = arith.subf %152, %104 : vector<8x128xf32>
    %cst_30 = arith.constant 0.000000e+00 : f32
    %154 = vector.broadcast %cst_30 : f32 to vector<8x128xf32>
    %155 = arith.maximumf %153, %154 : vector<8x128xf32>
    %156 = arith.mulf %155, %11 : vector<8x128xf32>
    %157 = arith.addf %151, %156 : vector<8x128xf32>
    %158 = arith.addf %36, %64 : vector<8x128xf32>
    %159 = arith.subf %158, %104 : vector<8x128xf32>
    %cst_31 = arith.constant 0.000000e+00 : f32
    %160 = vector.broadcast %cst_31 : f32 to vector<8x128xf32>
    %161 = arith.maximumf %159, %160 : vector<8x128xf32>
    %162 = arith.mulf %161, %13 : vector<8x128xf32>
    %163 = arith.addf %157, %162 : vector<8x128xf32>
    %164 = arith.addf %37, %65 : vector<8x128xf32>
    %165 = arith.subf %164, %106 : vector<8x128xf32>
    %cst_32 = arith.constant 0.000000e+00 : f32
    %166 = vector.broadcast %cst_32 : f32 to vector<8x128xf32>
    %167 = arith.maximumf %165, %166 : vector<8x128xf32>
    %168 = arith.mulf %167, %15 : vector<8x128xf32>
    %169 = arith.addf %163, %168 : vector<8x128xf32>
    %170 = arith.addf %38, %64 : vector<8x128xf32>
    %171 = arith.subf %170, %106 : vector<8x128xf32>
    %cst_33 = arith.constant 0.000000e+00 : f32
    %172 = vector.broadcast %cst_33 : f32 to vector<8x128xf32>
    %173 = arith.maximumf %171, %172 : vector<8x128xf32>
    %174 = arith.mulf %173, %17 : vector<8x128xf32>
    %175 = arith.addf %169, %174 : vector<8x128xf32>
    %176 = arith.addf %35, %65 : vector<8x128xf32>
    %177 = arith.subf %176, %120 : vector<8x128xf32>
    %cst_34 = arith.constant 0.000000e+00 : f32
    %178 = vector.broadcast %cst_34 : f32 to vector<8x128xf32>
    %179 = arith.maximumf %177, %178 : vector<8x128xf32>
    %180 = arith.addf %175, %179 : vector<8x128xf32>
    %181 = arith.subf %176, %116 : vector<8x128xf32>
    %cst_35 = arith.constant 0.000000e+00 : f32
    %182 = vector.broadcast %cst_35 : f32 to vector<8x128xf32>
    %183 = arith.maximumf %181, %182 : vector<8x128xf32>
    %184 = arith.addf %180, %183 : vector<8x128xf32>
    %185 = arith.addf %36, %65 : vector<8x128xf32>
    %186 = arith.subf %185, %120 : vector<8x128xf32>
    %cst_36 = arith.constant 0.000000e+00 : f32
    %187 = vector.broadcast %cst_36 : f32 to vector<8x128xf32>
    %188 = arith.maximumf %186, %187 : vector<8x128xf32>
    %189 = arith.addf %184, %188 : vector<8x128xf32>
    %190 = arith.subf %185, %112 : vector<8x128xf32>
    %cst_37 = arith.constant 0.000000e+00 : f32
    %191 = vector.broadcast %cst_37 : f32 to vector<8x128xf32>
    %192 = arith.maximumf %190, %191 : vector<8x128xf32>
    %193 = arith.addf %189, %192 : vector<8x128xf32>
    %194 = arith.addf %38, %62 : vector<8x128xf32>
    %195 = arith.subf %194, %120 : vector<8x128xf32>
    %cst_38 = arith.constant 0.000000e+00 : f32
    %196 = vector.broadcast %cst_38 : f32 to vector<8x128xf32>
    %197 = arith.maximumf %195, %196 : vector<8x128xf32>
    %198 = arith.addf %193, %197 : vector<8x128xf32>
    %199 = arith.subf %194, %116 : vector<8x128xf32>
    %cst_39 = arith.constant 0.000000e+00 : f32
    %200 = vector.broadcast %cst_39 : f32 to vector<8x128xf32>
    %201 = arith.maximumf %199, %200 : vector<8x128xf32>
    %202 = arith.addf %198, %201 : vector<8x128xf32>
    %203 = arith.addf %38, %63 : vector<8x128xf32>
    %204 = arith.subf %203, %120 : vector<8x128xf32>
    %cst_40 = arith.constant 0.000000e+00 : f32
    %205 = vector.broadcast %cst_40 : f32 to vector<8x128xf32>
    %206 = arith.maximumf %204, %205 : vector<8x128xf32>
    %207 = arith.addf %202, %206 : vector<8x128xf32>
    %208 = arith.subf %203, %112 : vector<8x128xf32>
    %cst_41 = arith.constant 0.000000e+00 : f32
    %209 = vector.broadcast %cst_41 : f32 to vector<8x128xf32>
    %210 = arith.maximumf %208, %209 : vector<8x128xf32>
    %211 = arith.addf %207, %210 : vector<8x128xf32>
    %212 = arith.index_cast %19 : i32 to index
    %c0_42 = arith.constant 0 : index
    %213 = vector.load %arg5[%212, %c0_42] : memref<8x128xf32, #tpu.memory_space<vmem>>, vector<8x128xf32>
    tpu.vector_store %arg5[%212, %c0_42], %211 {strides = array<i32>} : memref<8x128xf32, #tpu.memory_space<vmem>>, vector<8x128xf32>,
    %c1_i32 = arith.constant 1 : i32
    return
  }
  func.func @transform_0(%arg0: i32, %arg1: memref<9xf32, #tpu.memory_space<smem>>) -> (i32, i32, i32) {
    %c0_i32 = arith.constant 0 : i32
    %c0_i32_0 = arith.constant 0 : i32
    %c0_i32_1 = arith.constant 0 : i32
    return %c0_i32, %arg0, %c0_i32_0 : i32, i32, i32
  }
  func.func @transform_1(%arg0: i32, %arg1: memref<9xf32, #tpu.memory_space<smem>>) -> (i32, i32, i32) {
    %c0_i32 = arith.constant 0 : i32
    %c0_i32_0 = arith.constant 0 : i32
    %c0_i32_1 = arith.constant 0 : i32
    return %c0_i32, %arg0, %c0_i32_0 : i32, i32, i32
  }
  func.func @transform_2(%arg0: i32, %arg1: memref<9xf32, #tpu.memory_space<smem>>) -> (i32, i32, i32) {
    %c0_i32 = arith.constant 0 : i32
    %c0_i32_0 = arith.constant 0 : i32
    %c0_i32_1 = arith.constant 0 : i32
    return %c0_i32, %arg0, %c0_i32_0 : i32, i32, i32
  }
  func.func @transform_3(%arg0: i32, %arg1: memref<9xf32, #tpu.memory_space<smem>>) -> (i32, i32) {
    %c0_i32 = arith.constant 0 : i32
    %c0_i32_0 = arith.constant 0 : i32
    return %arg0, %c0_i32 : i32, i32
  }
}

</mosaic_0001>

<llo_original>
// kernel: tpu_custom_call.1
$region0: #{tpu_custom_call.1}
  #allocation0 [shape = 'u32[]', space=smem, size = 0x4, offset = 0x4, fixed_abs, tag = 'smem constant byte address 0x4 - core index']
  #allocation1 [shape = 'u32[72,128]{1,0:T(1,128)}', space=vmem, size = 0x9000, scoped, tag = 'internal scratch']
  #allocation2 [shape = 's32[1]{0}', space=sflag, size = 0x4, scoped, tag = 'scoped memory for tpu_custom_call.1']
  #allocation3 [shape = 'u8[512]{0}', space=smem, size = 0x200, scoped, tag = 'prefetched SMEM operand 0']
  %s0 = inlined_call_operand.hbm [shape: f32[9], index: 0, kind: input, shape index: {}]
  %s1 = inlined_call_operand.hbm [shape: f32[4,8,128], index: 1, kind: input, shape index: {}]
  %s2 = inlined_call_operand.hbm [shape: f32[4,8,128], index: 2, kind: input, shape index: {}]
  %s3 = inlined_call_operand.hbm [shape: f32[4,8,128], index: 3, kind: input, shape index: {}]
  %s4 = inlined_call_operand.hbm [shape: f32[8,128], index: 4, kind: output, shape index: {}]
  %s5 = sld [smem:[#allocation0]]
  $region34: #{tpu_custom_call.1} parent=0
    _
  %s7 = ssub.s32 1, %s5
  %s8 = scalar_select 0, %s7, %s5
  %s10 = sshll.u32 %s0, 4
  %s11 = int_to_ptr.hbm [resolvable:$true] %s10
  %13 = dma.hbm_to_smem %s11, 16, [#allocation3], [#allocation2]
  %15 = dma.done [#allocation2], 16
  %16 = sfence
  $region1: #{tpu_custom_call.1} parent=0
    #allocation4 [shape = 'u8[16384]{0}', space=vmem, size = 0x4000, scoped, tag = 'input window, operand 1, single buffered']
    #allocation5 [shape = 's32[1]{0}', space=sflag, size = 0x4, scoped, tag = 'scoped memory for tpu_custom_call.1']
    #allocation6 [shape = 's32[1]{0}', space=sflag, size = 0x4, scoped, tag = 'scoped memory for tpu_custom_call.1']
    #allocation7 [shape = 'u8[16384]{0}', space=vmem, size = 0x4000, scoped, tag = 'input window, operand 2, single buffered']
    #allocation8 [shape = 's32[1]{0}', space=sflag, size = 0x4, scoped, tag = 'scoped memory for tpu_custom_call.1']
    #allocation9 [shape = 'u8[16384]{0}', space=vmem, size = 0x4000, scoped, tag = 'input window, operand 3, single buffered']
    #allocation10 [shape = 'u8[4096]{0}', space=vmem, size = 0x1000, scoped, tag = 'output window, operand 0, single buffered']
    %17 = vsyncpa [#allocation5], 0
    %18 = vsyncpa [#allocation8], 0
    %19 = vsyncpa [#allocation6], 0
    // Predicated region
    $region2: #{tpu_custom_call.1} parent=1 // pred_check
      _
    $region3: #{tpu_custom_call.1} parent=1 // pred_check_branch
      %21 = sbr.rel (0) target = $region5
    $region4: #{tpu_custom_call.1} parent=1 // pred_region
      %23 = vsyncadd [#allocation5], 0
      %s24 = sshll.u32 %s1, 4
      %s25 = int_to_ptr.hbm [resolvable:$true] %s24
      %s26 = sshll.u32 [#allocation4], 4
      %s27 = int_to_ptr.vmem [resolvable:$true] %s26
      %32 = dma.hbm_to_vmem [thread:$0]  %s25, 512, %s27, [#allocation5], 128, 128, 8
    $region5: #{tpu_custom_call.1} parent=1 // pred_fallthru
      _
    // Predicated region
    $region6: #{tpu_custom_call.1} parent=1 // pred_check
      _
    $region7: #{tpu_custom_call.1} parent=1 // pred_check_branch
      %34 = sbr.rel (0) target = $region9
    $region8: #{tpu_custom_call.1} parent=1 // pred_region
      %36 = vsyncadd [#allocation8], 0
      %s37 = sshll.u32 %s2, 4
      %s38 = int_to_ptr.hbm [resolvable:$true] %s37
      %s39 = sshll.u32 [#allocation7], 4
      %s40 = int_to_ptr.vmem [resolvable:$true] %s39
      %45 = dma.hbm_to_vmem [thread:$0]  %s38, 512, %s40, [#allocation8], 128, 128, 8
    $region9: #{tpu_custom_call.1} parent=1 // pred_fallthru
      _
    // Predicated region
    $region10: #{tpu_custom_call.1} parent=1 // pred_check
      _
    $region11: #{tpu_custom_call.1} parent=1 // pred_check_branch
      %47 = sbr.rel (0) target = $region13
    $region12: #{tpu_custom_call.1} parent=1 // pred_region
      %49 = vsyncadd [#allocation8], 0
      %s50 = sshll.u32 %s3, 4
      %s51 = int_to_ptr.hbm [resolvable:$true] %s50
      %s52 = sshll.u32 [#allocation9], 4
      %s53 = int_to_ptr.vmem [resolvable:$true] %s52
      %58 = dma.hbm_to_vmem [thread:$0]  %s51, 512, %s53, [#allocation8], 128, 128, 8
    $region13: #{tpu_custom_call.1} parent=1 // pred_fallthru
      _
    // Predicated region
    $region14: #{tpu_custom_call.1} parent=1 // pred_check
      _
    $region15: #{tpu_custom_call.1} parent=1 // pred_check_branch
      %60 = sbr.rel (0) target = $region17
    $region16: #{tpu_custom_call.1} parent=1 // pred_region
      %62 = dma.done [#allocation5], 512
    $region17: #{tpu_custom_call.1} parent=1 // pred_fallthru
      _
    // Predicated region
    $region18: #{tpu_custom_call.1} parent=1 // pred_check
      _
    $region19: #{tpu_custom_call.1} parent=1 // pred_check_branch
      %64 = sbr.rel (0) target = $region21
    $region20: #{tpu_custom_call.1} parent=1 // pred_region
      %66 = dma.done [#allocation8], 512
    $region21: #{tpu_custom_call.1} parent=1 // pred_fallthru
      _
    // Predicated region
    $region22: #{tpu_custom_call.1} parent=1 // pred_check
      _
    $region23: #{tpu_custom_call.1} parent=1 // pred_check_branch
      %68 = sbr.rel (0) target = $region25
    $region24: #{tpu_custom_call.1} parent=1 // pred_region
      %70 = dma.done [#allocation8], 512
    $region25: #{tpu_custom_call.1} parent=1 // pred_fallthru
      _
    %s71 = sld [smem:[#allocation3]]
    %v72 = vstv %s71
    %s73 = sld [smem:[#allocation3 + $0x1]]
    %v74 = vstv %s73
    %s75 = sld [smem:[#allocation3 + $0x2]]
    %v76 = vstv %s75
    %s77 = sld [smem:[#allocation3 + $0x3]]
    %v78 = vstv %s77
    %s79 = sld [smem:[#allocation3 + $0x4]]
    %v80 = vstv %s79
    %s81 = sld [smem:[#allocation3 + $0x5]]
    %v82 = vstv %s81
    %s83 = sld [smem:[#allocation3 + $0x6]]
    %v84 = vstv %s83
    %s85 = sld [smem:[#allocation3 + $0x7]]
    %v86 = vstv %s85
    %s87 = sld [smem:[#allocation3 + $0x8]]
    %v88 = vstv %s87
    %v89 = vld [vmem:[#allocation4] sm:$0xff]
    %s90 = sadd.s32 0, 8
    %s91 = scalar_lea.vmem [#allocation4], %s90
    %v92 = vld [vmem:[%s91] sm:$0xff]
    %s93 = sadd.s32 0, 16
    %s94 = scalar_lea.vmem [#allocation4], %s93
    %v95 = vld [vmem:[%s94] sm:$0xff]
    %s96 = sadd.s32 0, 24
    %s97 = scalar_lea.vmem [#allocation4], %s96
    %v98 = vld [vmem:[%s97] sm:$0xff]
    %v99 = vmax.f32 %v89, %v92
    %v100 = vmax.f32 %v95, %v98
    %v101 = vmax.f32 %v99, %v100
    %v102 = vsub.f32 %v89, %v101
    %v103 = vsub.f32 %v92, %v101
    %v104 = vsub.f32 %v95, %v101
    %v105 = vsub.f32 %v98, %v101
    %v106 = vmul.f32 %v102, 1.442695
    %v107 = vpow.pop %v106
    %v108 = vmul.f32 %v103, 1.442695
    %v109 = vpow.pop %v108
    %v110 = vmul.f32 %v104, 1.442695
    %v111 = vpow.pop %v110
    %v112 = vmul.f32 %v105, 1.442695
    %v113 = vpow.pop %v112
    %v114 = vadd.f32 %v107, %v109
    %v115 = vadd.f32 %v111, %v113
    %v116 = vadd.f32 %v114, %v115
    %v117 = vlog2.pop %v116
    %v118 = vmul.f32 %v117, 0.6931472
    %v119 = vld [vmem:[#allocation7] sm:$0xff]
    %s120 = scalar_lea.vmem [#allocation7], %s90
    %v121 = vld [vmem:[%s120] sm:$0xff]
    %s122 = scalar_lea.vmem [#allocation7], %s93
    %v123 = vld [vmem:[%s122] sm:$0xff]
    %s124 = scalar_lea.vmem [#allocation7], %s96
    %v125 = vld [vmem:[%s124] sm:$0xff]
    %v126 = vmax.f32 %v119, %v121
    %v127 = vmax.f32 %v123, %v125
    %v128 = vmax.f32 %v126, %v127
    %v129 = vsub.f32 %v119, %v128
    %v130 = vsub.f32 %v121, %v128
    %v131 = vsub.f32 %v123, %v128
    %v132 = vsub.f32 %v125, %v128
    %v133 = vmul.f32 %v129, 1.442695
    %v134 = vpow.pop %v133
    %v135 = vmul.f32 %v130, 1.442695
    %v136 = vpow.pop %v135
    %v137 = vmul.f32 %v131, 1.442695
    %v138 = vpow.pop %v137
    %v139 = vmul.f32 %v132, 1.442695
    %v140 = vpow.pop %v139
    %v141 = vadd.f32 %v134, %v136
    %v142 = vadd.f32 %v138, %v140
    %v143 = vadd.f32 %v141, %v142
    %v144 = vlog2.pop %v143
    %v145 = vmul.f32 %v144, 0.6931472
    %v146 = vld [vmem:[#allocation9] sm:$0xff]
    %s147 = scalar_lea.vmem [#allocation9], %s90
    %v148 = vld [vmem:[%s147] sm:$0xff]
    %s149 = scalar_lea.vmem [#allocation9], %s93
    %v150 = vld [vmem:[%s149] sm:$0xff]
    %s151 = scalar_lea.vmem [#allocation9], %s96
    %v152 = vld [vmem:[%s151] sm:$0xff]
    %v153 = vmax.f32 %v146, %v148
    %v154 = vmax.f32 %v150, %v152
    %v155 = vmax.f32 %v153, %v154
    %v156 = vsub.f32 %v146, %v155
    %v157 = vsub.f32 %v148, %v155
    %v158 = vsub.f32 %v150, %v155
    %v159 = vsub.f32 %v152, %v155
    %v160 = vmul.f32 %v156, 1.442695
    %v161 = vpow.pop %v160
    %v162 = vmul.f32 %v157, 1.442695
    %v163 = vpow.pop %v162
    %v164 = vmul.f32 %v158, 1.442695
    %v165 = vpow.pop %v164
    %v166 = vmul.f32 %v159, 1.442695
    %v167 = vpow.pop %v166
    %v168 = vadd.f32 %v161, %v163
    %v169 = vadd.f32 %v165, %v167
    %v170 = vadd.f32 %v168, %v169
    %v171 = vlog2.pop %v170
    %v172 = vmul.f32 %v171, 0.6931472
    %v173 = vadd.f32 %v118, %v145
    %v174 = vsub.f32 %v173, %v172
    %v175 = vadd.f32 %v156, %v174
    %v176 = vadd.f32 %v157, %v174
    %v177 = vadd.f32 %v158, %v174
    %v178 = vadd.f32 %v159, %v174
    %v179 = vmul.f32 %v170, 1e-08
    %v180 = vsub.f32 %v170, %v161
    %v181 = vmax.f32 %v180, %v179
    %v182 = vlog2.pop %v181
    %v183 = vmul.f32 %v182, 0.6931472
    %v184 = vadd.f32 %v183, %v174
    %v185 = vsub.f32 %v170, %v163
    %v186 = vmax.f32 %v185, %v179
    %v187 = vlog2.pop %v186
    %v188 = vmul.f32 %v187, 0.6931472
    %v189 = vadd.f32 %v188, %v174
    %v190 = vsub.f32 %v170, %v165
    %v191 = vmax.f32 %v190, %v179
    %v192 = vlog2.pop %v191
    %v193 = vmul.f32 %v192, 0.6931472
    %v194 = vadd.f32 %v193, %v174
    %v195 = vadd.f32 %v104, %v130
    %v196 = vsub.f32 %v195, %v176
    %v197 = vmax.f32 %v196, 0.0
    %v198 = vmul.f32 %v197, %v72
    %v199 = vadd.f32 %v198, 0.0
    %v200 = vadd.f32 %v104, %v131
    %v201 = vsub.f32 %v200, %v177
    %v202 = vmax.f32 %v201, 0.0
    %v203 = vmul.f32 %v202, %v74
    %v204 = vadd.f32 %v199, %v203
    %v205 = vadd.f32 %v104, %v129
    %v206 = vsub.f32 %v205, %v175
    %v207 = vmax.f32 %v206, 0.0
    %v208 = vmul.f32 %v207, %v76
    %v209 = vadd.f32 %v204, %v208
    %v210 = vadd.f32 %v102, %v129
    %v211 = vsub.f32 %v210, %v175
    %v212 = vmax.f32 %v211, 0.0
    %v213 = vmul.f32 %v212, %v78
    %v214 = vadd.f32 %v209, %v213
    %v215 = vadd.f32 %v102, %v131
    %v216 = vsub.f32 %v215, %v175
    %v217 = vmax.f32 %v216, 0.0
    %v218 = vmul.f32 %v217, %v80
    %v219 = vadd.f32 %v214, %v218
    %v220 = vadd.f32 %v103, %v130
    %v221 = vsub.f32 %v220, %v176
    %v222 = vmax.f32 %v221, 0.0
    %v223 = vmul.f32 %v222, %v82
    %v224 = vadd.f32 %v219, %v223
    %v225 = vadd.f32 %v103, %v131
    %v226 = vsub.f32 %v225, %v176
    %v227 = vmax.f32 %v226, 0.0
    %v228 = vmul.f32 %v227, %v84
    %v229 = vadd.f32 %v224, %v228
    %v230 = vadd.f32 %v104, %v132
    %v231 = vsub.f32 %v230, %v178
    %v232 = vmax.f32 %v231, 0.0
    %v233 = vmul.f32 %v232, %v86
    %v234 = vadd.f32 %v229, %v233
    %v235 = vadd.f32 %v105, %v131
    %v236 = vsub.f32 %v235, %v178
    %v237 = vmax.f32 %v236, 0.0
    %v238 = vmul.f32 %v237, %v88
    %v239 = vadd.f32 %v234, %v238
    %v240 = vadd.f32 %v102, %v132
    %v241 = vsub.f32 %v240, %v194
    %v242 = vmax.f32 %v241, 0.0
    %v243 = vadd.f32 %v239, %v242
    %v244 = vsub.f32 %v240, %v189
    %v245 = vmax.f32 %v244, 0.0
    %v246 = vadd.f32 %v243, %v245
    %v247 = vadd.f32 %v103, %v132
    %v248 = vsub.f32 %v247, %v194
    %v249 = vmax.f32 %v248, 0.0
    %v250 = vadd.f32 %v246, %v249
    %v251 = vsub.f32 %v247, %v184
    %v252 = vmax.f32 %v251, 0.0
    %v253 = vadd.f32 %v250, %v252
    %v254 = vadd.f32 %v105, %v129
    %v255 = vsub.f32 %v254, %v194
    %v256 = vmax.f32 %v255, 0.0
    %v257 = vadd.f32 %v253, %v256
    %v258 = vsub.f32 %v254, %v189
    %v259 = vmax.f32 %v258, 0.0
    %v260 = vadd.f32 %v257, %v259
    %v261 = vadd.f32 %v105, %v130
    %v262 = vsub.f32 %v261, %v194
    %v263 = vmax.f32 %v262, 0.0
    %v264 = vadd.f32 %v260, %v263
    %v265 = vsub.f32 %v261, %v184
    %v266 = vmax.f32 %v265, 0.0
    %v267 = vadd.f32 %v264, %v266
    %268 = vst [vmem:[#allocation10] sm:$0xff] %v267
    // Predicated region
    $region26: #{tpu_custom_call.1} parent=1 // pred_check
      _
    $region27: #{tpu_custom_call.1} parent=1 // pred_check_branch
      %270 = sbr.rel (0) target = $region29
    $region28: #{tpu_custom_call.1} parent=1 // pred_region
      %272 = vsyncadd [#allocation6], 0
      %s274 = sshll.u32 [#allocation10], 4
      %s275 = int_to_ptr.vmem [resolvable:$true] %s274
      %s276 = sshll.u32 %s4, 4
      %s277 = int_to_ptr.hbm [resolvable:$true] %s276
      %279 = dma.vmem_to_hbm [thread:$0]  %s275, 128, %s277, [#allocation6]
    $region29: #{tpu_custom_call.1} parent=1 // pred_fallthru
      _
    // Predicated region
    $region30: #{tpu_custom_call.1} parent=1 // pred_check
      _
    $region31: #{tpu_custom_call.1} parent=1 // pred_check_branch
      %281 = sbr.rel (0) target = $region33
    $region32: #{tpu_custom_call.1} parent=1 // pred_region
      %283 = dma.done [#allocation6], 128
    $region33: #{tpu_custom_call.1} parent=1 // pred_fallthru
      _
    %284 = vsyncpa [#allocation5], 1
    %285 = vsyncpa [#allocation8], 1
    %286 = vsyncpa [#allocation6], 1

</llo_original>
